<compile_context>
chip_gen: v7x
topology: tpu7x:2x2x1
jax: 0.10.0
libtpu: 0.0.40
codegen_flags: <defaults>
</compile_context>

<pallas_src>
import functools

import jax
import jax.numpy as jnp
import numpy as np
from jax.experimental import pallas as pl
from jax.experimental.pallas import tpu as pltpu


_VMEM_LIMIT = 48 * 1024 * 1024  # < 64 MiB physical (v7x), < 128 MiB (v5e/v6e)


def _round_up(x, m):
    return ((x + m - 1) // m) * m


def _pick_tile(dim, candidates):
    """Largest candidate that evenly divides `dim`, else the full extent.

    Callers pad the relevant axis to a multiple of 128 first, so the fallback
    only triggers for small (demo-sized) extents.
    """
    for c in candidates:
        if dim % c == 0:
            return c
    return dim


def _pick_heads_per_block(num_heads, head_dim):
    """Smallest head group whose width is a multiple of 128 lanes; else all heads."""
    for hpb in range(1, num_heads + 1):
        if num_heads % hpb == 0 and (hpb * head_dim) % 128 == 0:
            return hpb
    return num_heads


# ---------------------------------------------------------------------------
# Fused Q/K/V projection: weights VMEM-resident (DMA'd once), rows stream.
# ---------------------------------------------------------------------------
def _qkv_kernel(x_ref, wq_ref, wk_ref, wv_ref, bq_ref, bv_ref,
                q_ref, k_ref, v_ref):
    x = x_ref[...]                                                    # bf16 (tm, K)
    q = jnp.dot(x, wq_ref[...], preferred_element_type=jnp.float32) + bq_ref[...]
    k = jnp.dot(x, wk_ref[...], preferred_element_type=jnp.float32)  # k_proj: bias=False
    v = jnp.dot(x, wv_ref[...], preferred_element_type=jnp.float32) + bv_ref[...]
    q_ref[...] = q.astype(q_ref.dtype)
    k_ref[...] = k.astype(k_ref.dtype)
    v_ref[...] = v.astype(v_ref.dtype)


def qkv_proj_pallas(x2d, wq, wk, wv, bq, bv, *, tm=None):
    """x2d: (M, K) bf16; wq/wk/wv: (K, E) bf16; bq/bv: (E,) f32 -> three (M, E) bf16 slabs."""
    M, K = x2d.shape
    N = wq.shape[1]
    tm = tm or _pick_tile(M, (256, 128))

    w_spec = pl.BlockSpec((K, N), lambda i: (0, 0))   # constant index map -> resident
    b_spec = pl.BlockSpec((1, N), lambda i: (0, 0))
    o_spec = pl.BlockSpec((tm, N), lambda i: (i, 0))
    out_sds = jax.ShapeDtypeStruct((M, N), x2d.dtype)

    return pl.pallas_call(
        _qkv_kernel,
        out_shape=(out_sds, out_sds, out_sds),
        grid_spec=pltpu.PrefetchScalarGridSpec(
            num_scalar_prefetch=0,
            grid=(M // tm,),                           # weights DMA'd once, x streams
            in_specs=[
                pl.BlockSpec((tm, K), lambda i: (i, 0)),
                w_spec, w_spec, w_spec, b_spec, b_spec,
            ],
            out_specs=(o_spec, o_spec, o_spec),
        ),
        compiler_params=pltpu.CompilerParams(
            dimension_semantics=("parallel",),
            vmem_limit_bytes=_VMEM_LIMIT),
    )(x2d, wq, wk, wv, bq.reshape(1, N), bv.reshape(1, N))


# ---------------------------------------------------------------------------
# Output projection: weight VMEM-resident, rows stream.
# ---------------------------------------------------------------------------
def _linear_kernel(x_ref, w_ref, b_ref, o_ref):
    o_ref[...] = (jnp.dot(x_ref[...], w_ref[...],
                          preferred_element_type=jnp.float32)
                  + b_ref[...]).astype(o_ref.dtype)


def linear_pallas(x2d, w, b, *, out_dtype=None, tm=None):
    M, K = x2d.shape
    N = w.shape[1]
    tm = tm or _pick_tile(M, (256, 128))
    out_dtype = out_dtype or x2d.dtype
    return pl.pallas_call(
        _linear_kernel,
        out_shape=jax.ShapeDtypeStruct((M, N), out_dtype),
        grid_spec=pltpu.PrefetchScalarGridSpec(
            num_scalar_prefetch=0,
            grid=(M // tm,),
            in_specs=[
                pl.BlockSpec((tm, K), lambda i: (i, 0)),
                pl.BlockSpec((K, N), lambda i: (0, 0)),
                pl.BlockSpec((1, N), lambda i: (0, 0)),
            ],
            out_specs=pl.BlockSpec((tm, N), lambda i: (i, 0)),
        ),
        compiler_params=pltpu.CompilerParams(
            dimension_semantics=("parallel",),
            vmem_limit_bytes=_VMEM_LIMIT),
    )(x2d, w, b.reshape(1, N))


# ---------------------------------------------------------------------------
# Attention: grid (B, head_blocks, q_blocks); per-head-group slices taken
# directly from the (B, T_pad, E) projection slabs (no HBM transposes).
# Padded key positions (>= valid_len) are masked to -inf.
# ---------------------------------------------------------------------------
def _attn_kernel(q_ref, k_ref, v_ref, o_ref, *, heads_per_block, head_dim,
                 valid_len, t_pad):
    # q_ref: (tq, W) bf16, k_ref/v_ref: (T_pad, W) bf16, o_ref: (tq, W) bf16.
    if valid_len < t_pad:
        col = jax.lax.broadcasted_iota(jnp.int32, (1, t_pad), 1)
        kv_valid = col < valid_len
    else:
        kv_valid = None

    outs = []
    for h in range(heads_per_block):
        sl = slice(h * head_dim, (h + 1) * head_dim)
        q = q_ref[:, sl]                 # softmax scale already folded into Wq/bq
        k = k_ref[:, sl]
        v = v_ref[:, sl]
        # QK^T without an explicit transpose: contract on the last dim of both.
        s = jax.lax.dot_general(q, k, (((1,), (1,)), ((), ())),
                                preferred_element_type=jnp.float32)   # (tq, T_pad)
        if kv_valid is not None:
            s = jnp.where(kv_valid, s, -jnp.inf)
        m = jnp.max(s, axis=-1, keepdims=True)                        # f32 softmax math
        p = jnp.exp(s - m)
        l = jnp.sum(p, axis=-1, keepdims=True)
        o = jax.lax.dot_general(p.astype(v.dtype), v, (((1,), (0,)), ((), ())),
                                preferred_element_type=jnp.float32)   # (tq, D)
        outs.append(o * pl.reciprocal(l, approx=True))
    # Single full-width, lane-dense store of the whole head-group block.
    o_ref[...] = jnp.concatenate(outs, axis=-1).astype(o_ref.dtype)


def attention_pallas(q, k, v, *, num_heads, valid_len, tq=None):
    """q/k/v: (B, T_pad, E) bf16 slabs -> (B, T_pad, E) bf16 attention output slab."""
    B, T_pad, E = q.shape
    D = E // num_heads
    hpb = _pick_heads_per_block(num_heads, D)
    W = hpb * D
    n_hb = num_heads // hpb
    tq = tq or _pick_tile(T_pad, (256, 128))
    n_qb = T_pad // tq

    q_spec = pl.BlockSpec((pl.Squeezed(), tq, W), lambda b, hb, qi: (b, qi, hb))
    kv_spec = pl.BlockSpec((pl.Squeezed(), T_pad, W), lambda b, hb, qi: (b, 0, hb))
    o_spec = pl.BlockSpec((pl.Squeezed(), tq, W), lambda b, hb, qi: (b, qi, hb))

    kernel = functools.partial(_attn_kernel, heads_per_block=hpb, head_dim=D,
                               valid_len=valid_len, t_pad=T_pad)
    return pl.pallas_call(
        kernel,
        out_shape=jax.ShapeDtypeStruct((B, T_pad, E), q.dtype),
        grid_spec=pltpu.PrefetchScalarGridSpec(
            num_scalar_prefetch=0,
            grid=(B, n_hb, n_qb),   # qi innermost -> K/V head-group block stays resident
            in_specs=[q_spec, kv_spec, kv_spec],
            out_specs=o_spec,
        ),
        compiler_params=pltpu.CompilerParams(
            dimension_semantics=("parallel", "parallel", "parallel"),
            vmem_limit_bytes=_VMEM_LIMIT),
    )(q, k, v)


# ---------------------------------------------------------------------------
# Module wrapper: pad T once, run bf16 kernels, slice padding off at the end.
# ---------------------------------------------------------------------------
def qwen2_audio_flash_attention2(hidden_states, params, num_heads,
                                 compute_dtype=jnp.bfloat16):
    B, T, E = hidden_states.shape
    D = E // num_heads
    assert D * num_heads == E
    scale = D ** (-0.5)
    out_dtype = hidden_states.dtype

    # Pad the time axis up to a multiple of 128 so row/query tiles stay in the
    # 128-256 range for any T (real Qwen2-Audio T=1500 -> 1536).
    T_pad = _round_up(T, 128)
    x = hidden_states
    if T_pad != T:
        x = jnp.pad(x, ((0, 0), (0, T_pad - T), (0, 0)))
    x2d = x.reshape(B * T_pad, E).astype(compute_dtype)

    # One-time weight prep: bf16 MXU operands, softmax scale folded into Wq/bq.
    wq = (params["wq"] * scale).astype(compute_dtype)
    bq = (params["bq"] * scale).astype(jnp.float32)
    wk = params["wk"].astype(compute_dtype)
    wv = params["wv"].astype(compute_dtype)
    bv = params["bv"].astype(jnp.float32)
    wo = params["wo"].astype(compute_dtype)
    bo = params["bo"].astype(jnp.float32)

    q2d, k2d, v2d = qkv_proj_pallas(x2d, wq, wk, wv, bq, bv)

    attn = attention_pallas(q2d.reshape(B, T_pad, E),
                            k2d.reshape(B, T_pad, E),
                            v2d.reshape(B, T_pad, E),
                            num_heads=num_heads, valid_len=T)

    out = linear_pallas(attn.reshape(B * T_pad, E), wo, bo, out_dtype=out_dtype)
    return out.reshape(B, T_pad, E)[:, :T, :]


# ---------------------------------------------------------------------------
# Pure-JAX f32 reference for verification.
# ---------------------------------------------------------------------------
def reference(hidden_states, params, num_heads):
    B, T, E = hidden_states.shape
    D = E // num_heads
    scale = D ** (-0.5)
    q = hidden_states @ params["wq"] + params["bq"]
    k = hidden_states @ params["wk"]
    v = hidden_states @ params["wv"] + params["bv"]
    qh = q.reshape(B, T, num_heads, D).transpose(0, 2, 1, 3)
    kh = k.reshape(B, T, num_heads, D).transpose(0, 2, 1, 3)
    vh = v.reshape(B, T, num_heads, D).transpose(0, 2, 1, 3)
    s = jnp.einsum("bhqd,bhkd->bhqk", qh, kh) * scale
    p = jax.nn.softmax(s, axis=-1)
    o = jnp.einsum("bhqk,bhkd->bhqd", p, vh)
    o = o.transpose(0, 2, 1, 3).reshape(B, T, E)
    return o @ params["wo"] + params["bo"]


if __name__ == "__main__":
    # Small shapes consistent with the module: embed_dim divisible by num_heads.
    B, T, E, H = 2, 8, 32, 4

    key = jax.random.PRNGKey(0)
    keys = jax.random.split(key, 9)
    scale_init = 1.0 / np.sqrt(E)
    params = {
        # weights stored as (in_features, out_features) so forward is x @ W + b
        "wq": jax.random.normal(keys[0], (E, E), jnp.float32) * scale_init,
        "bq": jax.random.normal(keys[1], (E,), jnp.float32) * 0.1,
        "wk": jax.random.normal(keys[2], (E, E), jnp.float32) * scale_init,
        "wv": jax.random.normal(keys[3], (E, E), jnp.float32) * scale_init,
        "bv": jax.random.normal(keys[4], (E,), jnp.float32) * 0.1,
        "wo": jax.random.normal(keys[5], (E, E), jnp.float32) * scale_init,
        "bo": jax.random.normal(keys[6], (E,), jnp.float32) * 0.1,
    }
    hidden_states = jax.random.normal(keys[7], (B, T, E), jnp.float32)

    out = qwen2_audio_flash_attention2(hidden_states, params, H)
    out = jax.block_until_ready(out)

    ref = reference(hidden_states, params, H)
    # bf16 MXU operands + approx reciprocal -> loosened tolerance vs f32 reference.
    np.testing.assert_allclose(np.asarray(out, dtype=np.float32),
                               np.asarray(ref), rtol=3e-2, atol=3e-2)

    print("KERNEL_OK")
</pallas_src>

<mosaic_0001>
module attributes {stable_mosaic.version = 11 : i64} {
  func.func @_qkv_kernel(%arg0: i32, %arg1: memref<256x32xbf16, #tpu.memory_space<vmem>>, %arg2: memref<32x32xbf16, #tpu.memory_space<vmem>>, %arg3: memref<32x32xbf16, #tpu.memory_space<vmem>>, %arg4: memref<32x32xbf16, #tpu.memory_space<vmem>>, %arg5: memref<1x32xf32, #tpu.memory_space<vmem>>, %arg6: memref<1x32xf32, #tpu.memory_space<vmem>>, %arg7: memref<256x32xbf16, #tpu.memory_space<vmem>>, %arg8: memref<256x32xbf16, #tpu.memory_space<vmem>>, %arg9: memref<256x32xbf16, #tpu.memory_space<vmem>>) attributes {dimension_semantics = [#tpu.dimension_semantics<parallel>], iteration_bounds = array<i64: 1>, scalar_prefetch = 0 : i64, scratch_operands = 0 : i64, tpu.core_type = #tpu.core_type<tc>, window_params = [{transform_indices = @transform_0, window_bounds = array<i64: 256, 32>}, {pipeline_mode = #tpu.pipeline_mode<synchronous>, transform_indices = @transform_1, window_bounds = array<i64: 32, 32>}, {pipeline_mode = #tpu.pipeline_mode<synchronous>, transform_indices = @transform_2, window_bounds = array<i64: 32, 32>}, {pipeline_mode = #tpu.pipeline_mode<synchronous>, transform_indices = @transform_3, window_bounds = array<i64: 32, 32>}, {pipeline_mode = #tpu.pipeline_mode<synchronous>, transform_indices = @transform_4, window_bounds = array<i64: 1, 32>}, {pipeline_mode = #tpu.pipeline_mode<synchronous>, transform_indices = @transform_5, window_bounds = array<i64: 1, 32>}, {transform_indices = @transform_6, window_bounds = array<i64: 256, 32>}, {transform_indices = @transform_7, window_bounds = array<i64: 256, 32>}, {transform_indices = @transform_8, window_bounds = array<i64: 256, 32>}]} {
    %c0 = arith.constant 0 : index
    %c0_0 = arith.constant 0 : index
    %0 = vector.load %arg1[%c0, %c0_0] : memref<256x32xbf16, #tpu.memory_space<vmem>>, vector<256x32xbf16>
    %c0_1 = arith.constant 0 : index
    %c0_2 = arith.constant 0 : index
    %1 = vector.load %arg2[%c0_1, %c0_2] : memref<32x32xbf16, #tpu.memory_space<vmem>>, vector<32x32xbf16>
    %cst = arith.constant dense<0.000000e+00> : vector<256x32xf32>
    %2 = tpu.matmul %0, %1, %cst {dimension_numbers = #tpu.dot_dimension_numbers<[1], [0], [0], [1], [0, 0, 1, 1], [], []>} : vector<256x32xbf16>, vector<32x32xbf16>, vector<256x32xf32> -> vector<256x32xf32>
    %c0_3 = arith.constant 0 : index
    %c0_4 = arith.constant 0 : index
    %3 = vector.load %arg5[%c0_3, %c0_4] : memref<1x32xf32, #tpu.memory_space<vmem>>, vector<1x32xf32>
    %4 = vector.broadcast %3 : vector<1x32xf32> to vector<256x32xf32>
    %5 = arith.addf %2, %4 : vector<256x32xf32>
    %c0_5 = arith.constant 0 : index
    %c0_6 = arith.constant 0 : index
    %6 = vector.load %arg3[%c0_5, %c0_6] : memref<32x32xbf16, #tpu.memory_space<vmem>>, vector<32x32xbf16>
    %cst_7 = arith.constant dense<0.000000e+00> : vector<256x32xf32>
    %7 = tpu.matmul %0, %6, %cst_7 {dimension_numbers = #tpu.dot_dimension_numbers<[1], [0], [0], [1], [0, 0, 1, 1], [], []>} : vector<256x32xbf16>, vector<32x32xbf16>, vector<256x32xf32> -> vector<256x32xf32>
    %c0_8 = arith.constant 0 : index
    %c0_9 = arith.constant 0 : index
    %8 = vector.load %arg4[%c0_8, %c0_9] : memref<32x32xbf16, #tpu.memory_space<vmem>>, vector<32x32xbf16>
    %cst_10 = arith.constant dense<0.000000e+00> : vector<256x32xf32>
    %9 = tpu.matmul %0, %8, %cst_10 {dimension_numbers = #tpu.dot_dimension_numbers<[1], [0], [0], [1], [0, 0, 1, 1], [], []>} : vector<256x32xbf16>, vector<32x32xbf16>, vector<256x32xf32> -> vector<256x32xf32>
    %c0_11 = arith.constant 0 : index
    %c0_12 = arith.constant 0 : index
    %10 = vector.load %arg6[%c0_11, %c0_12] : memref<1x32xf32, #tpu.memory_space<vmem>>, vector<1x32xf32>
    %11 = vector.broadcast %10 : vector<1x32xf32> to vector<256x32xf32>
    %12 = arith.addf %9, %11 : vector<256x32xf32>
    %13 = arith.truncf %5 : vector<256x32xf32> to vector<256x32xbf16>
    %c0_13 = arith.constant 0 : index
    %c0_14 = arith.constant 0 : index
    %14 = vector.load %arg7[%c0_13, %c0_14] : memref<256x32xbf16, #tpu.memory_space<vmem>>, vector<256x32xbf16>
    tpu.vector_store %arg7[%c0_13, %c0_14], %13 {strides = array<i32>} : memref<256x32xbf16, #tpu.memory_space<vmem>>, vector<256x32xbf16>,
    %15 = arith.truncf %7 : vector<256x32xf32> to vector<256x32xbf16>
    %c0_15 = arith.constant 0 : index
    %c0_16 = arith.constant 0 : index
    %16 = vector.load %arg8[%c0_15, %c0_16] : memref<256x32xbf16, #tpu.memory_space<vmem>>, vector<256x32xbf16>
    tpu.vector_store %arg8[%c0_15, %c0_16], %15 {strides = array<i32>} : memref<256x32xbf16, #tpu.memory_space<vmem>>, vector<256x32xbf16>,
    %17 = arith.truncf %12 : vector<256x32xf32> to vector<256x32xbf16>
    %c0_17 = arith.constant 0 : index
    %c0_18 = arith.constant 0 : index
    %18 = vector.load %arg9[%c0_17, %c0_18] : memref<256x32xbf16, #tpu.memory_space<vmem>>, vector<256x32xbf16>
    tpu.vector_store %arg9[%c0_17, %c0_18], %17 {strides = array<i32>} : memref<256x32xbf16, #tpu.memory_space<vmem>>, vector<256x32xbf16>,
    return
  }
  func.func @transform_0(%arg0: i32) -> (i32, i32) {
    %c0_i32 = arith.constant 0 : i32
    %c0_i32_0 = arith.constant 0 : i32
    return %arg0, %c0_i32 : i32, i32
  }
  func.func @transform_1(%arg0: i32) -> (i32, i32) {
    %c0_i32 = arith.constant 0 : i32
    %c0_i32_0 = arith.constant 0 : i32
    %c0_i32_1 = arith.constant 0 : i32
    return %c0_i32, %c0_i32_0 : i32, i32
  }
  func.func @transform_2(%arg0: i32) -> (i32, i32) {
    %c0_i32 = arith.constant 0 : i32
    %c0_i32_0 = arith.constant 0 : i32
    %c0_i32_1 = arith.constant 0 : i32
    return %c0_i32, %c0_i32_0 : i32, i32
  }
  func.func @transform_3(%arg0: i32) -> (i32, i32) {
    %c0_i32 = arith.constant 0 : i32
    %c0_i32_0 = arith.constant 0 : i32
    %c0_i32_1 = arith.constant 0 : i32
    return %c0_i32, %c0_i32_0 : i32, i32
  }
  func.func @transform_4(%arg0: i32) -> (i32, i32) {
    %c0_i32 = arith.constant 0 : i32
    %c0_i32_0 = arith.constant 0 : i32
    %c0_i32_1 = arith.constant 0 : i32
    return %c0_i32, %c0_i32_0 : i32, i32
  }
  func.func @transform_5(%arg0: i32) -> (i32, i32) {
    %c0_i32 = arith.constant 0 : i32
    %c0_i32_0 = arith.constant 0 : i32
    %c0_i32_1 = arith.constant 0 : i32
    return %c0_i32, %c0_i32_0 : i32, i32
  }
  func.func @transform_6(%arg0: i32) -> (i32, i32) {
    %c0_i32 = arith.constant 0 : i32
    %c0_i32_0 = arith.constant 0 : i32
    return %arg0, %c0_i32 : i32, i32
  }
  func.func @transform_7(%arg0: i32) -> (i32, i32) {
    %c0_i32 = arith.constant 0 : i32
    %c0_i32_0 = arith.constant 0 : i32
    return %arg0, %c0_i32 : i32, i32
  }
  func.func @transform_8(%arg0: i32) -> (i32, i32) {
    %c0_i32 = arith.constant 0 : i32
    %c0_i32_0 = arith.constant 0 : i32
    return %arg0, %c0_i32 : i32, i32
  }
}

</mosaic_0001>

<llo_original>
// kernel: tpu_custom_call.1
$region0: #{tpu_custom_call.1}
  #allocation0 [shape = 'u32[]', space=smem, size = 0x4, offset = 0x4, fixed_abs, tag = 'smem constant byte address 0x4 - core index']
  #allocation1 [shape = 'u32[144,128]{1,0:T(1,128)}', space=vmem, size = 0x12000, scoped, tag = 'internal scratch']
  %s0 = inlined_call_operand.vmem [shape: bf16[256,32], index: 0, kind: input, shape index: {}]
  %s1 = inlined_call_operand.vmem [shape: bf16[32,32], index: 1, kind: input, shape index: {}]
  %s2 = inlined_call_operand.vmem [shape: bf16[32,32], index: 2, kind: input, shape index: {}]
  %s3 = inlined_call_operand.vmem [shape: bf16[32,32], index: 3, kind: input, shape index: {}]
  %s4 = inlined_call_operand.vmem [shape: f32[1,32], index: 4, kind: input, shape index: {}]
  %s5 = inlined_call_operand.vmem [shape: f32[1,32], index: 5, kind: input, shape index: {}]
  %s6 = inlined_call_operand.vmem [shape: bf16[256,32], index: 6, kind: output, shape index: {0}]
  %s7 = inlined_call_operand.vmem [shape: bf16[256,32], index: 7, kind: output, shape index: {1}]
  %s8 = inlined_call_operand.vmem [shape: bf16[256,32], index: 8, kind: output, shape index: {2}]
  %9 = xla_tuple %s6, %s7, %s8
  %s10 = sld [smem:[#allocation0]]
  $region50: #{tpu_custom_call.1} parent=0
    _
  %s12 = ssub.s32 1, %s10
  %s13 = scalar_select 0, %s12, %s10
  // Predicated region
  $region2: #{tpu_custom_call.1} parent=0 // pred_check
    _
  $region3: #{tpu_custom_call.1} parent=0 // pred_check_branch
    %15 = sbr.rel (0) target = $region5
  $region4: #{tpu_custom_call.1} parent=0 // pred_region
    _
  $region5: #{tpu_custom_call.1} parent=0 // pred_fallthru
    _
  // Predicated region
  $region6: #{tpu_custom_call.1} parent=0 // pred_check
    _
  $region7: #{tpu_custom_call.1} parent=0 // pred_check_branch
    %17 = sbr.rel (0) target = $region9
  $region8: #{tpu_custom_call.1} parent=0 // pred_region
    _
  $region9: #{tpu_custom_call.1} parent=0 // pred_fallthru
    _
  // Predicated region
  $region10: #{tpu_custom_call.1} parent=0 // pred_check
    _
  $region11: #{tpu_custom_call.1} parent=0 // pred_check_branch
    %19 = sbr.rel (0) target = $region13
  $region12: #{tpu_custom_call.1} parent=0 // pred_region
    _
  $region13: #{tpu_custom_call.1} parent=0 // pred_fallthru
    _
  // Predicated region
  $region14: #{tpu_custom_call.1} parent=0 // pred_check
    _
  $region15: #{tpu_custom_call.1} parent=0 // pred_check_branch
    %21 = sbr.rel (0) target = $region17
  $region16: #{tpu_custom_call.1} parent=0 // pred_region
    _
  $region17: #{tpu_custom_call.1} parent=0 // pred_fallthru
    _
  // Predicated region
  $region18: #{tpu_custom_call.1} parent=0 // pred_check
    _
  $region19: #{tpu_custom_call.1} parent=0 // pred_check_branch
    %23 = sbr.rel (0) target = $region21
  $region20: #{tpu_custom_call.1} parent=0 // pred_region
    _
  $region21: #{tpu_custom_call.1} parent=0 // pred_fallthru
    _
  // Predicated region
  $region22: #{tpu_custom_call.1} parent=0 // pred_check
    _
  $region23: #{tpu_custom_call.1} parent=0 // pred_check_branch
    %25 = sbr.rel (0) target = $region25
  $region24: #{tpu_custom_call.1} parent=0 // pred_region
    _
  $region25: #{tpu_custom_call.1} parent=0 // pred_fallthru
    _
  %v27 = vld [vmem:[%s0] sm:$0xf]
  %v28 = vld [vmem:[%s0 + $0x4] sm:$0xf]
  %v29 = vld [vmem:[%s0 + $0x8] sm:$0xf]
  %v30 = vld [vmem:[%s0 + $0xc] sm:$0xf]
  %v31 = vld [vmem:[%s0 + $0x10] sm:$0xf]
  %v32 = vld [vmem:[%s0 + $0x14] sm:$0xf]
  %v33 = vld [vmem:[%s0 + $0x18] sm:$0xf]
  %v34 = vld [vmem:[%s0 + $0x1c] sm:$0xf]
  %v35 = vld [vmem:[%s0 + $0x20] sm:$0xf]
  %v36 = vld [vmem:[%s0 + $0x24] sm:$0xf]
  %v37 = vld [vmem:[%s0 + $0x28] sm:$0xf]
  %v38 = vld [vmem:[%s0 + $0x2c] sm:$0xf]
  %v39 = vld [vmem:[%s0 + $0x30] sm:$0xf]
  %v40 = vld [vmem:[%s0 + $0x34] sm:$0xf]
  %v41 = vld [vmem:[%s0 + $0x38] sm:$0xf]
  %v42 = vld [vmem:[%s0 + $0x3c] sm:$0xf]
  %v43 = vld [vmem:[%s0 + $0x40] sm:$0xf]
  %v44 = vld [vmem:[%s0 + $0x44] sm:$0xf]
  %v45 = vld [vmem:[%s0 + $0x48] sm:$0xf]
  %v46 = vld [vmem:[%s0 + $0x4c] sm:$0xf]
  %v47 = vld [vmem:[%s0 + $0x50] sm:$0xf]
  %v48 = vld [vmem:[%s0 + $0x54] sm:$0xf]
  %v49 = vld [vmem:[%s0 + $0x58] sm:$0xf]
  %v50 = vld [vmem:[%s0 + $0x5c] sm:$0xf]
  %v51 = vld [vmem:[%s0 + $0x60] sm:$0xf]
  %v52 = vld [vmem:[%s0 + $0x64] sm:$0xf]
  %v53 = vld [vmem:[%s0 + $0x68] sm:$0xf]
  %v54 = vld [vmem:[%s0 + $0x6c] sm:$0xf]
  %v55 = vld [vmem:[%s0 + $0x70] sm:$0xf]
  %v56 = vld [vmem:[%s0 + $0x74] sm:$0xf]
  %v57 = vld [vmem:[%s0 + $0x78] sm:$0xf]
  %v58 = vld [vmem:[%s0 + $0x7c] sm:$0xf]
  %v59 = vld [vmem:[%s1] sm:$0xf]
  %v60 = vld [vmem:[%s1 + $0x4] sm:$0xf]
  %v61 = vld [vmem:[%s1 + $0x8] sm:$0xf]
  %v62 = vld [vmem:[%s1 + $0xc] sm:$0xf]
  %v63 = vld [vmem:[%s4] sm:$0x1]
  %v65 = vlaneseq
  %v66 = vshrl.u32 %v65, 7
  %v67 = vsub.s32 0, %v66
  %v68 = vrot.slane %v63, %v67
  %v102 = vunpack.c.l.b16 %v27
  %v103 = vunpack.c.l.b16 %v28
  %v104 = vunpack.c.l.b16 %v29
  %v105 = vunpack.c.l.b16 %v30
  %v106 = vunpack.c.l.b16 %v31
  %v107 = vunpack.c.l.b16 %v32
  %v108 = vunpack.c.l.b16 %v33
  %v109 = vunpack.c.l.b16 %v34
  %v110 = vunpack.c.l.b16 %v35
  %v111 = vunpack.c.l.b16 %v36
  %v112 = vunpack.c.l.b16 %v37
  %v113 = vunpack.c.l.b16 %v38
  %v114 = vunpack.c.l.b16 %v39
  %v115 = vunpack.c.l.b16 %v40
  %v116 = vunpack.c.l.b16 %v41
  %v117 = vunpack.c.l.b16 %v42
  %v118 = vunpack.c.l.b16 %v43
  %v119 = vunpack.c.l.b16 %v44
  %v120 = vunpack.c.l.b16 %v45
  %v121 = vunpack.c.l.b16 %v46
  %v122 = vunpack.c.l.b16 %v47
  %v123 = vunpack.c.l.b16 %v48
  %v124 = vunpack.c.l.b16 %v49
  %v125 = vunpack.c.l.b16 %v50
  %v126 = vunpack.c.l.b16 %v51
  %v127 = vunpack.c.l.b16 %v52
  %v128 = vunpack.c.l.b16 %v53
  %v129 = vunpack.c.l.b16 %v54
  %v130 = vunpack.c.l.b16 %v55
  %v131 = vunpack.c.l.b16 %v56
  %v132 = vunpack.c.l.b16 %v57
  %v133 = vunpack.c.l.b16 %v58
  %v134 = vpack.c.b16 %v103, %v102
  %v135 = vpack.c.b16 %v105, %v104
  %v136 = vpack.c.b16 %v107, %v106
  %v137 = vpack.c.b16 %v109, %v108
  %v138 = vpack.c.b16 %v111, %v110
  %v139 = vpack.c.b16 %v113, %v112
  %v140 = vpack.c.b16 %v115, %v114
  %v141 = vpack.c.b16 %v117, %v116
  %v142 = vpack.c.b16 %v119, %v118
  %v143 = vpack.c.b16 %v121, %v120
  %v144 = vpack.c.b16 %v123, %v122
  %v145 = vpack.c.b16 %v125, %v124
  %v146 = vpack.c.b16 %v127, %v126
  %v147 = vpack.c.b16 %v129, %v128
  %v148 = vpack.c.b16 %v131, %v130
  %v149 = vpack.c.b16 %v133, %v132
  %v154 = vunpack.c.l.b16 %v59
  %v155 = vunpack.c.l.b16 %v60
  %v156 = vunpack.c.l.b16 %v61
  %v157 = vunpack.c.l.b16 %v62
  %v158 = vpack.c.b16 %v155, %v154
  %v159 = vpack.c.b16 %v157, %v156
  %vm162 = vcmask 261120
  %v164 = vsel %vm162, %v134, 0
  %v167 = vsel %vm162, %v135, 0
  %v170 = vsel %vm162, %v136, 0
  %v173 = vsel %vm162, %v137, 0
  %v176 = vsel %vm162, %v138, 0
  %v179 = vsel %vm162, %v139, 0
  %v182 = vsel %vm162, %v140, 0
  %v185 = vsel %vm162, %v141, 0
  %v188 = vsel %vm162, %v142, 0
  %v191 = vsel %vm162, %v143, 0
  %v194 = vsel %vm162, %v144, 0
  %v197 = vsel %vm162, %v145, 0
  %v200 = vsel %vm162, %v146, 0
  %v203 = vsel %vm162, %v147, 0
  %v206 = vsel %vm162, %v148, 0
  %v209 = vsel %vm162, %v149, 0
  %211 = vmatprep.subr.bf16.mxu0 0
  %212 = vmatpush1.bf16.msra.mxu0 %v158
  %213 = vmatprep.subr.bf16.mxu0 0
  %214 = vmatpush1.bf16.msra.mxu0 %v159
  %215 = vmatprep.subr.bf16.mxu0 0
  %216 = vmatpush1.bf16.msra.mxu0 0
  %217 = vmatprep.subr.bf16.mxu0 0
  %218 = vmatpush1.bf16.msra.mxu0 0
  %219 = vmatprep.subr.bf16.mxu0 0
  %220 = vmatpush1.bf16.msra.mxu0 0
  %221 = vmatprep.subr.bf16.mxu0 0
  %222 = vmatpush1.bf16.msra.mxu0 0
  %223 = vmatprep.subr.bf16.mxu0 0
  %224 = vmatpush1.bf16.msra.mxu0 0
  %225 = vmatprep.subr.bf16.mxu0 0
  %226 = vmatpush1.bf16.msra.mxu0 0
  %227 = vmatprep.subr.bf16.mxu0 0
  %228 = vmatpush1.bf16.msra.mxu0 0
  %229 = vmatprep.subr.bf16.mxu0 0
  %230 = vmatpush1.bf16.msra.mxu0 0
  %231 = vmatprep.subr.bf16.mxu0 0
  %232 = vmatpush1.bf16.msra.mxu0 0
  %233 = vmatprep.subr.bf16.mxu0 0
  %234 = vmatpush1.bf16.msra.mxu0 0
  %235 = vmatprep.subr.bf16.mxu0 0
  %236 = vmatpush1.bf16.msra.mxu0 0
  %237 = vmatprep.subr.bf16.mxu0 0
  %238 = vmatpush1.bf16.msra.mxu0 0
  %239 = vmatprep.subr.bf16.mxu0 0
  %240 = vmatpush1.bf16.msra.mxu0 0
  %241 = vmatprep.subr.bf16.mxu0 0
  %242 = vmatpush1.bf16.msra.mxu0 0
  %243 = vmatprep.mubr.bf16.mxu0 0
  %244 = vmatmul.mubr.bf16.gmra.mrb[0].mxu0 %v164
  %v245 = vpop.f32.mrb[0].mxu0
  %v246 = vadd.f32 %v68, %v245
  %v247 = vpop.f32.mrb[0].mxu0
  %v248 = vpop.f32.mrb[0].mxu0
  %v249 = vadd.f32 %v68, %v248
  %v250 = vpop.f32.mrb[0].mxu0
  %251 = vmatprep.mubr.bf16.mxu0 0
  %252 = vmatmul.mubr.bf16.gmra.mrb[0].mxu0 %v167
  %v253 = vpop.f32.mrb[0].mxu0
  %v254 = vadd.f32 %v68, %v253
  %v255 = vpop.f32.mrb[0].mxu0
  %v256 = vpop.f32.mrb[0].mxu0
  %v257 = vadd.f32 %v68, %v256
  %v258 = vpop.f32.mrb[0].mxu0
  %259 = vmatprep.mubr.bf16.mxu0 0
  %260 = vmatmul.mubr.bf16.gmra.mrb[0].mxu0 %v170
  %v261 = vpop.f32.mrb[0].mxu0
  %v262 = vadd.f32 %v68, %v261
  %v263 = vpop.f32.mrb[0].mxu0
  %v264 = vpop.f32.mrb[0].mxu0
  %v265 = vadd.f32 %v68, %v264
  %v266 = vpop.f32.mrb[0].mxu0
  %267 = vmatprep.mubr.bf16.mxu0 0
  %268 = vmatmul.mubr.bf16.gmra.mrb[0].mxu0 %v173
  %v269 = vpop.f32.mrb[0].mxu0
  %v270 = vadd.f32 %v68, %v269
  %v271 = vpop.f32.mrb[0].mxu0
  %v272 = vpop.f32.mrb[0].mxu0
  %v273 = vadd.f32 %v68, %v272
  %v274 = vpop.f32.mrb[0].mxu0
  %275 = vmatprep.mubr.bf16.mxu0 0
  %276 = vmatmul.mubr.bf16.gmra.mrb[0].mxu0 %v176
  %v277 = vpop.f32.mrb[0].mxu0
  %v278 = vadd.f32 %v68, %v277
  %v279 = vpop.f32.mrb[0].mxu0
  %v280 = vpop.f32.mrb[0].mxu0
  %v281 = vadd.f32 %v68, %v280
  %v282 = vpop.f32.mrb[0].mxu0
  %283 = vmatprep.mubr.bf16.mxu0 0
  %284 = vmatmul.mubr.bf16.gmra.mrb[0].mxu0 %v179
  %v285 = vpop.f32.mrb[0].mxu0
  %v286 = vadd.f32 %v68, %v285
  %v287 = vpop.f32.mrb[0].mxu0
  %v288 = vpop.f32.mrb[0].mxu0
  %v289 = vadd.f32 %v68, %v288
  %v290 = vpop.f32.mrb[0].mxu0
  %291 = vmatprep.mubr.bf16.mxu0 0
  %292 = vmatmul.mubr.bf16.gmra.mrb[0].mxu0 %v182
  %v293 = vpop.f32.mrb[0].mxu0
  %v294 = vadd.f32 %v68, %v293
  %v295 = vpop.f32.mrb[0].mxu0
  %v296 = vpop.f32.mrb[0].mxu0
  %v297 = vadd.f32 %v68, %v296
  %v298 = vpop.f32.mrb[0].mxu0
  %299 = vmatprep.mubr.bf16.mxu0 0
  %300 = vmatmul.mubr.bf16.gmra.mrb[0].mxu0 %v185
  %v301 = vpop.f32.mrb[0].mxu0
  %v302 = vadd.f32 %v68, %v301
  %v303 = vpop.f32.mrb[0].mxu0
  %v304 = vpop.f32.mrb[0].mxu0
  %v305 = vadd.f32 %v68, %v304
  %v306 = vpop.f32.mrb[0].mxu0
  %307 = vmatprep.mubr.bf16.mxu0 0
  %308 = vmatmul.mubr.bf16.gmra.mrb[0].mxu0 %v188
  %v309 = vpop.f32.mrb[0].mxu0
  %v310 = vadd.f32 %v68, %v309
  %v311 = vpop.f32.mrb[0].mxu0
  %v312 = vpop.f32.mrb[0].mxu0
  %v313 = vadd.f32 %v68, %v312
  %v314 = vpop.f32.mrb[0].mxu0
  %315 = vmatprep.mubr.bf16.mxu0 0
  %316 = vmatmul.mubr.bf16.gmra.mrb[0].mxu0 %v191
  %v317 = vpop.f32.mrb[0].mxu0
  %v318 = vadd.f32 %v68, %v317
  %v319 = vpop.f32.mrb[0].mxu0
  %v320 = vpop.f32.mrb[0].mxu0
  %v321 = vadd.f32 %v68, %v320
  %v322 = vpop.f32.mrb[0].mxu0
  %323 = vmatprep.mubr.bf16.mxu0 0
  %324 = vmatmul.mubr.bf16.gmra.mrb[0].mxu0 %v194
  %v325 = vpop.f32.mrb[0].mxu0
  %v326 = vadd.f32 %v68, %v325
  %v327 = vpop.f32.mrb[0].mxu0
  %v328 = vpop.f32.mrb[0].mxu0
  %v329 = vadd.f32 %v68, %v328
  %v330 = vpop.f32.mrb[0].mxu0
  %331 = vmatprep.mubr.bf16.mxu0 0
  %332 = vmatmul.mubr.bf16.gmra.mrb[0].mxu0 %v197
  %v333 = vpop.f32.mrb[0].mxu0
  %v334 = vadd.f32 %v68, %v333
  %v335 = vpop.f32.mrb[0].mxu0
  %v336 = vpop.f32.mrb[0].mxu0
  %v337 = vadd.f32 %v68, %v336
  %v338 = vpop.f32.mrb[0].mxu0
  %339 = vmatprep.mubr.bf16.mxu0 0
  %340 = vmatmul.mubr.bf16.gmra.mrb[0].mxu0 %v200
  %v341 = vpop.f32.mrb[0].mxu0
  %v342 = vadd.f32 %v68, %v341
  %v343 = vpop.f32.mrb[0].mxu0
  %v344 = vpop.f32.mrb[0].mxu0
  %v345 = vadd.f32 %v68, %v344
  %v346 = vpop.f32.mrb[0].mxu0
  %347 = vmatprep.mubr.bf16.mxu0 0
  %348 = vmatmul.mubr.bf16.gmra.mrb[0].mxu0 %v203
  %v349 = vpop.f32.mrb[0].mxu0
  %v350 = vadd.f32 %v68, %v349
  %v351 = vpop.f32.mrb[0].mxu0
  %v352 = vpop.f32.mrb[0].mxu0
  %v353 = vadd.f32 %v68, %v352
  %v354 = vpop.f32.mrb[0].mxu0
  %355 = vmatprep.mubr.bf16.mxu0 0
  %356 = vmatmul.mubr.bf16.gmra.mrb[0].mxu0 %v206
  %v357 = vpop.f32.mrb[0].mxu0
  %v358 = vadd.f32 %v68, %v357
  %v359 = vpop.f32.mrb[0].mxu0
  %v360 = vpop.f32.mrb[0].mxu0
  %v361 = vadd.f32 %v68, %v360
  %v362 = vpop.f32.mrb[0].mxu0
  %363 = vmatprep.mubr.bf16.mxu0 0
  %364 = vmatmul.mubr.bf16.gmra.mrb[0].mxu0 %v209
  %v365 = vpop.f32.mrb[0].mxu0
  %v366 = vadd.f32 %v68, %v365
  %v367 = vpop.f32.mrb[0].mxu0
  %v368 = vpop.f32.mrb[0].mxu0
  %v369 = vadd.f32 %v68, %v368
  %v370 = vpop.f32.mrb[0].mxu0
  %371 = vdwg.mxu0
  %v372 = vld [vmem:[%s2] sm:$0xf]
  %v373 = vld [vmem:[%s2 + $0x4] sm:$0xf]
  %v374 = vld [vmem:[%s2 + $0x8] sm:$0xf]
  %v375 = vld [vmem:[%s2 + $0xc] sm:$0xf]
  %v380 = vunpack.c.l.b16 %v372
  %v381 = vunpack.c.l.b16 %v373
  %v382 = vunpack.c.l.b16 %v374
  %v383 = vunpack.c.l.b16 %v375
  %v384 = vpack.c.b16 %v381, %v380
  %v385 = vpack.c.b16 %v383, %v382
  %388 = vmatprep.subr.bf16.mxu0 0
  %389 = vmatpush1.bf16.msra.mxu0 %v384
  %390 = vmatprep.subr.bf16.mxu0 0
  %391 = vmatpush1.bf16.msra.mxu0 %v385
  %392 = vmatprep.subr.bf16.mxu0 0
  %393 = vmatpush1.bf16.msra.mxu0 0
  %394 = vmatprep.subr.bf16.mxu0 0
  %395 = vmatpush1.bf16.msra.mxu0 0
  %396 = vmatprep.subr.bf16.mxu0 0
  %397 = vmatpush1.bf16.msra.mxu0 0
  %398 = vmatprep.subr.bf16.mxu0 0
  %399 = vmatpush1.bf16.msra.mxu0 0
  %400 = vmatprep.subr.bf16.mxu0 0
  %401 = vmatpush1.bf16.msra.mxu0 0
  %402 = vmatprep.subr.bf16.mxu0 0
  %403 = vmatpush1.bf16.msra.mxu0 0
  %404 = vmatprep.subr.bf16.mxu0 0
  %405 = vmatpush1.bf16.msra.mxu0 0
  %406 = vmatprep.subr.bf16.mxu0 0
  %407 = vmatpush1.bf16.msra.mxu0 0
  %408 = vmatprep.subr.bf16.mxu0 0
  %409 = vmatpush1.bf16.msra.mxu0 0
  %410 = vmatprep.subr.bf16.mxu0 0
  %411 = vmatpush1.bf16.msra.mxu0 0
  %412 = vmatprep.subr.bf16.mxu0 0
  %413 = vmatpush1.bf16.msra.mxu0 0
  %414 = vmatprep.subr.bf16.mxu0 0
  %415 = vmatpush1.bf16.msra.mxu0 0
  %416 = vmatprep.subr.bf16.mxu0 0
  %417 = vmatpush1.bf16.msra.mxu0 0
  %418 = vmatprep.subr.bf16.mxu0 0
  %419 = vmatpush1.bf16.msra.mxu0 0
  %420 = vmatprep.mubr.bf16.mxu0 0
  %421 = vmatmul.mubr.bf16.gmra.mrb[0].mxu0 %v164
  %v422 = vpop.f32.mrb[0].mxu0
  %v423 = vadd.f32 0.0, %v422
  %v424 = vpop.f32.mrb[0].mxu0
  %v425 = vpop.f32.mrb[0].mxu0
  %v426 = vadd.f32 0.0, %v425
  %v427 = vpop.f32.mrb[0].mxu0
  %428 = vmatprep.mubr.bf16.mxu0 0
  %429 = vmatmul.mubr.bf16.gmra.mrb[0].mxu0 %v167
  %v430 = vpop.f32.mrb[0].mxu0
  %v431 = vadd.f32 0.0, %v430
  %v432 = vpop.f32.mrb[0].mxu0
  %v433 = vpop.f32.mrb[0].mxu0
  %v434 = vadd.f32 0.0, %v433
  %v435 = vpop.f32.mrb[0].mxu0
  %436 = vmatprep.mubr.bf16.mxu0 0
  %437 = vmatmul.mubr.bf16.gmra.mrb[0].mxu0 %v170
  %v438 = vpop.f32.mrb[0].mxu0
  %v439 = vadd.f32 0.0, %v438
  %v440 = vpop.f32.mrb[0].mxu0
  %v441 = vpop.f32.mrb[0].mxu0
  %v442 = vadd.f32 0.0, %v441
  %v443 = vpop.f32.mrb[0].mxu0
  %444 = vmatprep.mubr.bf16.mxu0 0
  %445 = vmatmul.mubr.bf16.gmra.mrb[0].mxu0 %v173
  %v446 = vpop.f32.mrb[0].mxu0
  %v447 = vadd.f32 0.0, %v446
  %v448 = vpop.f32.mrb[0].mxu0
  %v449 = vpop.f32.mrb[0].mxu0
  %v450 = vadd.f32 0.0, %v449
  %v451 = vpop.f32.mrb[0].mxu0
  %452 = vmatprep.mubr.bf16.mxu0 0
  %453 = vmatmul.mubr.bf16.gmra.mrb[0].mxu0 %v176
  %v454 = vpop.f32.mrb[0].mxu0
  %v455 = vadd.f32 0.0, %v454
  %v456 = vpop.f32.mrb[0].mxu0
  %v457 = vpop.f32.mrb[0].mxu0
  %v458 = vadd.f32 0.0, %v457
  %v459 = vpop.f32.mrb[0].mxu0
  %460 = vmatprep.mubr.bf16.mxu0 0
  %461 = vmatmul.mubr.bf16.gmra.mrb[0].mxu0 %v179
  %v462 = vpop.f32.mrb[0].mxu0
  %v463 = vadd.f32 0.0, %v462
  %v464 = vpop.f32.mrb[0].mxu0
  %v465 = vpop.f32.mrb[0].mxu0
  %v466 = vadd.f32 0.0, %v465
  %v467 = vpop.f32.mrb[0].mxu0
  %468 = vmatprep.mubr.bf16.mxu0 0
  %469 = vmatmul.mubr.bf16.gmra.mrb[0].mxu0 %v182
  %v470 = vpop.f32.mrb[0].mxu0
  %v471 = vadd.f32 0.0, %v470
  %v472 = vpop.f32.mrb[0].mxu0
  %v473 = vpop.f32.mrb[0].mxu0
  %v474 = vadd.f32 0.0, %v473
  %v475 = vpop.f32.mrb[0].mxu0
  %476 = vmatprep.mubr.bf16.mxu0 0
  %477 = vmatmul.mubr.bf16.gmra.mrb[0].mxu0 %v185
  %v478 = vpop.f32.mrb[0].mxu0
  %v479 = vadd.f32 0.0, %v478
  %v480 = vpop.f32.mrb[0].mxu0
  %v481 = vpop.f32.mrb[0].mxu0
  %v482 = vadd.f32 0.0, %v481
  %v483 = vpop.f32.mrb[0].mxu0
  %484 = vmatprep.mubr.bf16.mxu0 0
  %485 = vmatmul.mubr.bf16.gmra.mrb[0].mxu0 %v188
  %v486 = vpop.f32.mrb[0].mxu0
  %v487 = vadd.f32 0.0, %v486
  %v488 = vpop.f32.mrb[0].mxu0
  %v489 = vpop.f32.mrb[0].mxu0
  %v490 = vadd.f32 0.0, %v489
  %v491 = vpop.f32.mrb[0].mxu0
  %492 = vmatprep.mubr.bf16.mxu0 0
  %493 = vmatmul.mubr.bf16.gmra.mrb[0].mxu0 %v191
  %v494 = vpop.f32.mrb[0].mxu0
  %v495 = vadd.f32 0.0, %v494
  %v496 = vpop.f32.mrb[0].mxu0
  %v497 = vpop.f32.mrb[0].mxu0
  %v498 = vadd.f32 0.0, %v497
  %v499 = vpop.f32.mrb[0].mxu0
  %500 = vmatprep.mubr.bf16.mxu0 0
  %501 = vmatmul.mubr.bf16.gmra.mrb[0].mxu0 %v194
  %v502 = vpop.f32.mrb[0].mxu0
  %v503 = vadd.f32 0.0, %v502
  %v504 = vpop.f32.mrb[0].mxu0
  %v505 = vpop.f32.mrb[0].mxu0
  %v506 = vadd.f32 0.0, %v505
  %v507 = vpop.f32.mrb[0].mxu0
  %508 = vmatprep.mubr.bf16.mxu0 0
  %509 = vmatmul.mubr.bf16.gmra.mrb[0].mxu0 %v197
  %v510 = vpop.f32.mrb[0].mxu0
  %v511 = vadd.f32 0.0, %v510
  %v512 = vpop.f32.mrb[0].mxu0
  %v513 = vpop.f32.mrb[0].mxu0
  %v514 = vadd.f32 0.0, %v513
  %v515 = vpop.f32.mrb[0].mxu0
  %516 = vmatprep.mubr.bf16.mxu0 0
  %517 = vmatmul.mubr.bf16.gmra.mrb[0].mxu0 %v200
  %v518 = vpop.f32.mrb[0].mxu0
  %v519 = vadd.f32 0.0, %v518
  %v520 = vpop.f32.mrb[0].mxu0
  %v521 = vpop.f32.mrb[0].mxu0
  %v522 = vadd.f32 0.0, %v521
  %v523 = vpop.f32.mrb[0].mxu0
  %524 = vmatprep.mubr.bf16.mxu0 0
  %525 = vmatmul.mubr.bf16.gmra.mrb[0].mxu0 %v203
  %v526 = vpop.f32.mrb[0].mxu0
  %v527 = vadd.f32 0.0, %v526
  %v528 = vpop.f32.mrb[0].mxu0
  %v529 = vpop.f32.mrb[0].mxu0
  %v530 = vadd.f32 0.0, %v529
  %v531 = vpop.f32.mrb[0].mxu0
  %532 = vmatprep.mubr.bf16.mxu0 0
  %533 = vmatmul.mubr.bf16.gmra.mrb[0].mxu0 %v206
  %v534 = vpop.f32.mrb[0].mxu0
  %v535 = vadd.f32 0.0, %v534
  %v536 = vpop.f32.mrb[0].mxu0
  %v537 = vpop.f32.mrb[0].mxu0
  %v538 = vadd.f32 0.0, %v537
  %v539 = vpop.f32.mrb[0].mxu0
  %540 = vmatprep.mubr.bf16.mxu0 0
  %541 = vmatmul.mubr.bf16.gmra.mrb[0].mxu0 %v209
  %v542 = vpop.f32.mrb[0].mxu0
  %v543 = vadd.f32 0.0, %v542
  %v544 = vpop.f32.mrb[0].mxu0
  %v545 = vpop.f32.mrb[0].mxu0
  %v546 = vadd.f32 0.0, %v545
  %v547 = vpop.f32.mrb[0].mxu0
  %548 = vdwg.mxu0
  %v549 = vld [vmem:[%s3] sm:$0xf]
  %v550 = vld [vmem:[%s3 + $0x4] sm:$0xf]
  %v551 = vld [vmem:[%s3 + $0x8] sm:$0xf]
  %v552 = vld [vmem:[%s3 + $0xc] sm:$0xf]
  %v553 = vld [vmem:[%s5] sm:$0x1]
  %v555 = vlaneseq
  %v556 = vshrl.u32 %v555, 7
  %v557 = vsub.s32 0, %v556
  %v558 = vrot.slane %v553, %v557
  %v564 = vunpack.c.l.b16 %v549
  %v565 = vunpack.c.l.b16 %v550
  %v566 = vunpack.c.l.b16 %v551
  %v567 = vunpack.c.l.b16 %v552
  %v568 = vpack.c.b16 %v565, %v564
  %v569 = vpack.c.b16 %v567, %v566
  %572 = vmatprep.subr.bf16.mxu0 0
  %573 = vmatpush1.bf16.msra.mxu0 %v568
  %574 = vmatprep.subr.bf16.mxu0 0
  %575 = vmatpush1.bf16.msra.mxu0 %v569
  %576 = vmatprep.subr.bf16.mxu0 0
  %577 = vmatpush1.bf16.msra.mxu0 0
  %578 = vmatprep.subr.bf16.mxu0 0
  %579 = vmatpush1.bf16.msra.mxu0 0
  %580 = vmatprep.subr.bf16.mxu0 0
  %581 = vmatpush1.bf16.msra.mxu0 0
  %582 = vmatprep.subr.bf16.mxu0 0
  %583 = vmatpush1.bf16.msra.mxu0 0
  %584 = vmatprep.subr.bf16.mxu0 0
  %585 = vmatpush1.bf16.msra.mxu0 0
  %586 = vmatprep.subr.bf16.mxu0 0
  %587 = vmatpush1.bf16.msra.mxu0 0
  %588 = vmatprep.subr.bf16.mxu0 0
  %589 = vmatpush1.bf16.msra.mxu0 0
  %590 = vmatprep.subr.bf16.mxu0 0
  %591 = vmatpush1.bf16.msra.mxu0 0
  %592 = vmatprep.subr.bf16.mxu0 0
  %593 = vmatpush1.bf16.msra.mxu0 0
  %594 = vmatprep.subr.bf16.mxu0 0
  %595 = vmatpush1.bf16.msra.mxu0 0
  %596 = vmatprep.subr.bf16.mxu0 0
  %597 = vmatpush1.bf16.msra.mxu0 0
  %598 = vmatprep.subr.bf16.mxu0 0
  %599 = vmatpush1.bf16.msra.mxu0 0
  %600 = vmatprep.subr.bf16.mxu0 0
  %601 = vmatpush1.bf16.msra.mxu0 0
  %602 = vmatprep.subr.bf16.mxu0 0
  %603 = vmatpush1.bf16.msra.mxu0 0
  %604 = vmatprep.mubr.bf16.mxu0 0
  %605 = vmatmul.mubr.bf16.gmra.mrb[0].mxu0 %v164
  %v606 = vpop.f32.mrb[0].mxu0
  %v607 = vadd.f32 %v558, %v606
  %v608 = vpop.f32.mrb[0].mxu0
  %v609 = vpop.f32.mrb[0].mxu0
  %v610 = vadd.f32 %v558, %v609
  %v611 = vpop.f32.mrb[0].mxu0
  %612 = vmatprep.mubr.bf16.mxu0 0
  %613 = vmatmul.mubr.bf16.gmra.mrb[0].mxu0 %v167
  %v614 = vpop.f32.mrb[0].mxu0
  %v615 = vadd.f32 %v558, %v614
  %v616 = vpop.f32.mrb[0].mxu0
  %v617 = vpop.f32.mrb[0].mxu0
  %v618 = vadd.f32 %v558, %v617
  %v619 = vpop.f32.mrb[0].mxu0
  %620 = vmatprep.mubr.bf16.mxu0 0
  %621 = vmatmul.mubr.bf16.gmra.mrb[0].mxu0 %v170
  %v622 = vpop.f32.mrb[0].mxu0
  %v623 = vadd.f32 %v558, %v622
  %v624 = vpop.f32.mrb[0].mxu0
  %v625 = vpop.f32.mrb[0].mxu0
  %v626 = vadd.f32 %v558, %v625
  %v627 = vpop.f32.mrb[0].mxu0
  %628 = vmatprep.mubr.bf16.mxu0 0
  %629 = vmatmul.mubr.bf16.gmra.mrb[0].mxu0 %v173
  %v630 = vpop.f32.mrb[0].mxu0
  %v631 = vadd.f32 %v558, %v630
  %v632 = vpop.f32.mrb[0].mxu0
  %v633 = vpop.f32.mrb[0].mxu0
  %v634 = vadd.f32 %v558, %v633
  %v635 = vpop.f32.mrb[0].mxu0
  %636 = vmatprep.mubr.bf16.mxu0 0
  %637 = vmatmul.mubr.bf16.gmra.mrb[0].mxu0 %v176
  %v638 = vpop.f32.mrb[0].mxu0
  %v639 = vadd.f32 %v558, %v638
  %v640 = vpop.f32.mrb[0].mxu0
  %v641 = vpop.f32.mrb[0].mxu0
  %v642 = vadd.f32 %v558, %v641
  %v643 = vpop.f32.mrb[0].mxu0
  %644 = vmatprep.mubr.bf16.mxu0 0
  %645 = vmatmul.mubr.bf16.gmra.mrb[0].mxu0 %v179
  %v646 = vpop.f32.mrb[0].mxu0
  %v647 = vadd.f32 %v558, %v646
  %v648 = vpop.f32.mrb[0].mxu0
  %v649 = vpop.f32.mrb[0].mxu0
  %v650 = vadd.f32 %v558, %v649
  %v651 = vpop.f32.mrb[0].mxu0
  %652 = vmatprep.mubr.bf16.mxu0 0
  %653 = vmatmul.mubr.bf16.gmra.mrb[0].mxu0 %v182
  %v654 = vpop.f32.mrb[0].mxu0
  %v655 = vadd.f32 %v558, %v654
  %v656 = vpop.f32.mrb[0].mxu0
  %v657 = vpop.f32.mrb[0].mxu0
  %v658 = vadd.f32 %v558, %v657
  %v659 = vpop.f32.mrb[0].mxu0
  %660 = vmatprep.mubr.bf16.mxu0 0
  %661 = vmatmul.mubr.bf16.gmra.mrb[0].mxu0 %v185
  %v662 = vpop.f32.mrb[0].mxu0
  %v663 = vadd.f32 %v558, %v662
  %v664 = vpop.f32.mrb[0].mxu0
  %v665 = vpop.f32.mrb[0].mxu0
  %v666 = vadd.f32 %v558, %v665
  %v667 = vpop.f32.mrb[0].mxu0
  %668 = vmatprep.mubr.bf16.mxu0 0
  %669 = vmatmul.mubr.bf16.gmra.mrb[0].mxu0 %v188
  %v670 = vpop.f32.mrb[0].mxu0
  %v671 = vadd.f32 %v558, %v670
  %v672 = vpop.f32.mrb[0].mxu0
  %v673 = vpop.f32.mrb[0].mxu0
  %v674 = vadd.f32 %v558, %v673
  %v675 = vpop.f32.mrb[0].mxu0
  %676 = vmatprep.mubr.bf16.mxu0 0
  %677 = vmatmul.mubr.bf16.gmra.mrb[0].mxu0 %v191
  %v678 = vpop.f32.mrb[0].mxu0
  %v679 = vadd.f32 %v558, %v678
  %v680 = vpop.f32.mrb[0].mxu0
  %v681 = vpop.f32.mrb[0].mxu0
  %v682 = vadd.f32 %v558, %v681
  %v683 = vpop.f32.mrb[0].mxu0
  %684 = vmatprep.mubr.bf16.mxu0 0
  %685 = vmatmul.mubr.bf16.gmra.mrb[0].mxu0 %v194
  %v686 = vpop.f32.mrb[0].mxu0
  %v687 = vadd.f32 %v558, %v686
  %v688 = vpop.f32.mrb[0].mxu0
  %v689 = vpop.f32.mrb[0].mxu0
  %v690 = vadd.f32 %v558, %v689
  %v691 = vpop.f32.mrb[0].mxu0
  %692 = vmatprep.mubr.bf16.mxu0 0
  %693 = vmatmul.mubr.bf16.gmra.mrb[0].mxu0 %v197
  %v694 = vpop.f32.mrb[0].mxu0
  %v695 = vadd.f32 %v558, %v694
  %v696 = vpop.f32.mrb[0].mxu0
  %v697 = vpop.f32.mrb[0].mxu0
  %v698 = vadd.f32 %v558, %v697
  %v699 = vpop.f32.mrb[0].mxu0
  %700 = vmatprep.mubr.bf16.mxu0 0
  %701 = vmatmul.mubr.bf16.gmra.mrb[0].mxu0 %v200
  %v702 = vpop.f32.mrb[0].mxu0
  %v703 = vadd.f32 %v558, %v702
  %v704 = vpop.f32.mrb[0].mxu0
  %v705 = vpop.f32.mrb[0].mxu0
  %v706 = vadd.f32 %v558, %v705
  %v707 = vpop.f32.mrb[0].mxu0
  %708 = vmatprep.mubr.bf16.mxu0 0
  %709 = vmatmul.mubr.bf16.gmra.mrb[0].mxu0 %v203
  %v710 = vpop.f32.mrb[0].mxu0
  %v711 = vadd.f32 %v558, %v710
  %v712 = vpop.f32.mrb[0].mxu0
  %v713 = vpop.f32.mrb[0].mxu0
  %v714 = vadd.f32 %v558, %v713
  %v715 = vpop.f32.mrb[0].mxu0
  %716 = vmatprep.mubr.bf16.mxu0 0
  %717 = vmatmul.mubr.bf16.gmra.mrb[0].mxu0 %v206
  %v718 = vpop.f32.mrb[0].mxu0
  %v719 = vadd.f32 %v558, %v718
  %v720 = vpop.f32.mrb[0].mxu0
  %v721 = vpop.f32.mrb[0].mxu0
  %v722 = vadd.f32 %v558, %v721
  %v723 = vpop.f32.mrb[0].mxu0
  %724 = vmatprep.mubr.bf16.mxu0 0
  %725 = vmatmul.mubr.bf16.gmra.mrb[0].mxu0 %v209
  %v726 = vpop.f32.mrb[0].mxu0
  %v727 = vadd.f32 %v558, %v726
  %v728 = vpop.f32.mrb[0].mxu0
  %v729 = vpop.f32.mrb[0].mxu0
  %v730 = vadd.f32 %v558, %v729
  %v731 = vpop.f32.mrb[0].mxu0
  %732 = vdwg.mxu0
  %v733 = vpack.c.bf16 %v249, %v246
  %v734 = vpack.c.bf16 %v257, %v254
  %v735 = vpack.c.bf16 %v265, %v262
  %v736 = vpack.c.bf16 %v273, %v270
  %v737 = vpack.c.bf16 %v281, %v278
  %v738 = vpack.c.bf16 %v289, %v286
  %v739 = vpack.c.bf16 %v297, %v294
  %v740 = vpack.c.bf16 %v305, %v302
  %v741 = vpack.c.bf16 %v313, %v310
  %v742 = vpack.c.bf16 %v321, %v318
  %v743 = vpack.c.bf16 %v329, %v326
  %v744 = vpack.c.bf16 %v337, %v334
  %v745 = vpack.c.bf16 %v345, %v342
  %v746 = vpack.c.bf16 %v353, %v350
  %v747 = vpack.c.bf16 %v361, %v358
  %v748 = vpack.c.bf16 %v369, %v366
  %v765 = vunpack.c.l.b16 %v733
  %v766 = vunpack.c.h.b16 %v733
  %v767 = vunpack.c.l.b16 %v734
  %v768 = vunpack.c.h.b16 %v734
  %v769 = vunpack.c.l.b16 %v735
  %v770 = vunpack.c.h.b16 %v735
  %v771 = vunpack.c.l.b16 %v736
  %v772 = vunpack.c.h.b16 %v736
  %v773 = vunpack.c.l.b16 %v737
  %v774 = vunpack.c.h.b16 %v737
  %v775 = vunpack.c.l.b16 %v738
  %v776 = vunpack.c.h.b16 %v738
  %v777 = vunpack.c.l.b16 %v739
  %v778 = vunpack.c.h.b16 %v739
  %v779 = vunpack.c.l.b16 %v740
  %v780 = vunpack.c.h.b16 %v740
  %v781 = vunpack.c.l.b16 %v741
  %v782 = vunpack.c.h.b16 %v741
  %v783 = vunpack.c.l.b16 %v742
  %v784 = vunpack.c.h.b16 %v742
  %v785 = vunpack.c.l.b16 %v743
  %v786 = vunpack.c.h.b16 %v743
  %v787 = vunpack.c.l.b16 %v744
  %v788 = vunpack.c.h.b16 %v744
  %v789 = vunpack.c.l.b16 %v745
  %v790 = vunpack.c.h.b16 %v745
  %v791 = vunpack.c.l.b16 %v746
  %v792 = vunpack.c.h.b16 %v746
  %v793 = vunpack.c.l.b16 %v747
  %v794 = vunpack.c.h.b16 %v747
  %v795 = vunpack.c.l.b16 %v748
  %v796 = vunpack.c.h.b16 %v748
  %v797 = vpack.c.b16 %v765, %v765
  %v798 = vpack.c.b16 %v766, %v766
  %v799 = vpack.c.b16 %v767, %v767
  %v800 = vpack.c.b16 %v768, %v768
  %v801 = vpack.c.b16 %v769, %v769
  %v802 = vpack.c.b16 %v770, %v770
  %v803 = vpack.c.b16 %v771, %v771
  %v804 = vpack.c.b16 %v772, %v772
  %v805 = vpack.c.b16 %v773, %v773
  %v806 = vpack.c.b16 %v774, %v774
  %v807 = vpack.c.b16 %v775, %v775
  %v808 = vpack.c.b16 %v776, %v776
  %v809 = vpack.c.b16 %v777, %v777
  %v810 = vpack.c.b16 %v778, %v778
  %v811 = vpack.c.b16 %v779, %v779
  %v812 = vpack.c.b16 %v780, %v780
  %v813 = vpack.c.b16 %v781, %v781
  %v814 = vpack.c.b16 %v782, %v782
  %v815 = vpack.c.b16 %v783, %v783
  %v816 = vpack.c.b16 %v784, %v784
  %v817 = vpack.c.b16 %v785, %v785
  %v818 = vpack.c.b16 %v786, %v786
  %v819 = vpack.c.b16 %v787, %v787
  %v820 = vpack.c.b16 %v788, %v788
  %v821 = vpack.c.b16 %v789, %v789
  %v822 = vpack.c.b16 %v790, %v790
  %v823 = vpack.c.b16 %v791, %v791
  %v824 = vpack.c.b16 %v792, %v792
  %v825 = vpack.c.b16 %v793, %v793
  %v826 = vpack.c.b16 %v794, %v794
  %v827 = vpack.c.b16 %v795, %v795
  %v828 = vpack.c.b16 %v796, %v796
  %vm861 = vcmask 257024
  %862 = vst.msk [vmem:[%s6] sm:$0xf] %vm861, %v797
  %863 = vst.msk [vmem:[%s6 + $0x4] sm:$0xf] %vm861, %v798
  %864 = vst.msk [vmem:[%s6 + $0x8] sm:$0xf] %vm861, %v799
  %865 = vst.msk [vmem:[%s6 + $0xc] sm:$0xf] %vm861, %v800
  %866 = vst.msk [vmem:[%s6 + $0x10] sm:$0xf] %vm861, %v801
  %867 = vst.msk [vmem:[%s6 + $0x14] sm:$0xf] %vm861, %v802
  %868 = vst.msk [vmem:[%s6 + $0x18] sm:$0xf] %vm861, %v803
  %869 = vst.msk [vmem:[%s6 + $0x1c] sm:$0xf] %vm861, %v804
  %870 = vst.msk [vmem:[%s6 + $0x20] sm:$0xf] %vm861, %v805
  %871 = vst.msk [vmem:[%s6 + $0x24] sm:$0xf] %vm861, %v806
  %872 = vst.msk [vmem:[%s6 + $0x28] sm:$0xf] %vm861, %v807
  %873 = vst.msk [vmem:[%s6 + $0x2c] sm:$0xf] %vm861, %v808
  %874 = vst.msk [vmem:[%s6 + $0x30] sm:$0xf] %vm861, %v809
  %875 = vst.msk [vmem:[%s6 + $0x34] sm:$0xf] %vm861, %v810
  %876 = vst.msk [vmem:[%s6 + $0x38] sm:$0xf] %vm861, %v811
  %877 = vst.msk [vmem:[%s6 + $0x3c] sm:$0xf] %vm861, %v812
  %878 = vst.msk [vmem:[%s6 + $0x40] sm:$0xf] %vm861, %v813
  %879 = vst.msk [vmem:[%s6 + $0x44] sm:$0xf] %vm861, %v814
  %880 = vst.msk [vmem:[%s6 + $0x48] sm:$0xf] %vm861, %v815
  %881 = vst.msk [vmem:[%s6 + $0x4c] sm:$0xf] %vm861, %v816
  %882 = vst.msk [vmem:[%s6 + $0x50] sm:$0xf] %vm861, %v817
  %883 = vst.msk [vmem:[%s6 + $0x54] sm:$0xf] %vm861, %v818
  %884 = vst.msk [vmem:[%s6 + $0x58] sm:$0xf] %vm861, %v819
  %885 = vst.msk [vmem:[%s6 + $0x5c] sm:$0xf] %vm861, %v820
  %886 = vst.msk [vmem:[%s6 + $0x60] sm:$0xf] %vm861, %v821
  %887 = vst.msk [vmem:[%s6 + $0x64] sm:$0xf] %vm861, %v822
  %888 = vst.msk [vmem:[%s6 + $0x68] sm:$0xf] %vm861, %v823
  %889 = vst.msk [vmem:[%s6 + $0x6c] sm:$0xf] %vm861, %v824
  %890 = vst.msk [vmem:[%s6 + $0x70] sm:$0xf] %vm861, %v825
  %891 = vst.msk [vmem:[%s6 + $0x74] sm:$0xf] %vm861, %v826
  %892 = vst.msk [vmem:[%s6 + $0x78] sm:$0xf] %vm861, %v827
  %893 = vst.msk [vmem:[%s6 + $0x7c] sm:$0xf] %vm861, %v828
  %v894 = vpack.c.bf16 %v426, %v423
  %v895 = vpack.c.bf16 %v434, %v431
  %v896 = vpack.c.bf16 %v442, %v439
  %v897 = vpack.c.bf16 %v450, %v447
  %v898 = vpack.c.bf16 %v458, %v455
  %v899 = vpack.c.bf16 %v466, %v463
  %v900 = vpack.c.bf16 %v474, %v471
  %v901 = vpack.c.bf16 %v482, %v479
  %v902 = vpack.c.bf16 %v490, %v487
  %v903 = vpack.c.bf16 %v498, %v495
  %v904 = vpack.c.bf16 %v506, %v503
  %v905 = vpack.c.bf16 %v514, %v511
  %v906 = vpack.c.bf16 %v522, %v519
  %v907 = vpack.c.bf16 %v530, %v527
  %v908 = vpack.c.bf16 %v538, %v535
  %v909 = vpack.c.bf16 %v546, %v543
  %v926 = vunpack.c.l.b16 %v894
  %v927 = vunpack.c.h.b16 %v894
  %v928 = vunpack.c.l.b16 %v895
  %v929 = vunpack.c.h.b16 %v895
  %v930 = vunpack.c.l.b16 %v896
  %v931 = vunpack.c.h.b16 %v896
  %v932 = vunpack.c.l.b16 %v897
  %v933 = vunpack.c.h.b16 %v897
  %v934 = vunpack.c.l.b16 %v898
  %v935 = vunpack.c.h.b16 %v898
  %v936 = vunpack.c.l.b16 %v899
  %v937 = vunpack.c.h.b16 %v899
  %v938 = vunpack.c.l.b16 %v900
  %v939 = vunpack.c.h.b16 %v900
  %v940 = vunpack.c.l.b16 %v901
  %v941 = vunpack.c.h.b16 %v901
  %v942 = vunpack.c.l.b16 %v902
  %v943 = vunpack.c.h.b16 %v902
  %v944 = vunpack.c.l.b16 %v903
  %v945 = vunpack.c.h.b16 %v903
  %v946 = vunpack.c.l.b16 %v904
  %v947 = vunpack.c.h.b16 %v904
  %v948 = vunpack.c.l.b16 %v905
  %v949 = vunpack.c.h.b16 %v905
  %v950 = vunpack.c.l.b16 %v906
  %v951 = vunpack.c.h.b16 %v906
  %v952 = vunpack.c.l.b16 %v907
  %v953 = vunpack.c.h.b16 %v907
  %v954 = vunpack.c.l.b16 %v908
  %v955 = vunpack.c.h.b16 %v908
  %v956 = vunpack.c.l.b16 %v909
  %v957 = vunpack.c.h.b16 %v909
  %v958 = vpack.c.b16 %v926, %v926
  %v959 = vpack.c.b16 %v927, %v927
  %v960 = vpack.c.b16 %v928, %v928
  %v961 = vpack.c.b16 %v929, %v929
  %v962 = vpack.c.b16 %v930, %v930
  %v963 = vpack.c.b16 %v931, %v931
  %v964 = vpack.c.b16 %v932, %v932
  %v965 = vpack.c.b16 %v933, %v933
  %v966 = vpack.c.b16 %v934, %v934
  %v967 = vpack.c.b16 %v935, %v935
  %v968 = vpack.c.b16 %v936, %v936
  %v969 = vpack.c.b16 %v937, %v937
  %v970 = vpack.c.b16 %v938, %v938
  %v971 = vpack.c.b16 %v939, %v939
  %v972 = vpack.c.b16 %v940, %v940
  %v973 = vpack.c.b16 %v941, %v941
  %v974 = vpack.c.b16 %v942, %v942
  %v975 = vpack.c.b16 %v943, %v943
  %v976 = vpack.c.b16 %v944, %v944
  %v977 = vpack.c.b16 %v945, %v945
  %v978 = vpack.c.b16 %v946, %v946
  %v979 = vpack.c.b16 %v947, %v947
  %v980 = vpack.c.b16 %v948, %v948
  %v981 = vpack.c.b16 %v949, %v949
  %v982 = vpack.c.b16 %v950, %v950
  %v983 = vpack.c.b16 %v951, %v951
  %v984 = vpack.c.b16 %v952, %v952
  %v985 = vpack.c.b16 %v953, %v953
  %v986 = vpack.c.b16 %v954, %v954
  %v987 = vpack.c.b16 %v955, %v955
  %v988 = vpack.c.b16 %v956, %v956
  %v989 = vpack.c.b16 %v957, %v957
  %1022 = vst.msk [vmem:[%s7] sm:$0xf] %vm861, %v958
  %1023 = vst.msk [vmem:[%s7 + $0x4] sm:$0xf] %vm861, %v959
  %1024 = vst.msk [vmem:[%s7 + $0x8] sm:$0xf] %vm861, %v960
  %1025 = vst.msk [vmem:[%s7 + $0xc] sm:$0xf] %vm861, %v961
  %1026 = vst.msk [vmem:[%s7 + $0x10] sm:$0xf] %vm861, %v962
  %1027 = vst.msk [vmem:[%s7 + $0x14] sm:$0xf] %vm861, %v963
  %1028 = vst.msk [vmem:[%s7 + $0x18] sm:$0xf] %vm861, %v964
  %1029 = vst.msk [vmem:[%s7 + $0x1c] sm:$0xf] %vm861, %v965
  %1030 = vst.msk [vmem:[%s7 + $0x20] sm:$0xf] %vm861, %v966
  %1031 = vst.msk [vmem:[%s7 + $0x24] sm:$0xf] %vm861, %v967
  %1032 = vst.msk [vmem:[%s7 + $0x28] sm:$0xf] %vm861, %v968
  %1033 = vst.msk [vmem:[%s7 + $0x2c] sm:$0xf] %vm861, %v969
  %1034 = vst.msk [vmem:[%s7 + $0x30] sm:$0xf] %vm861, %v970
  %1035 = vst.msk [vmem:[%s7 + $0x34] sm:$0xf] %vm861, %v971
  %1036 = vst.msk [vmem:[%s7 + $0x38] sm:$0xf] %vm861, %v972
  %1037 = vst.msk [vmem:[%s7 + $0x3c] sm:$0xf] %vm861, %v973
  %1038 = vst.msk [vmem:[%s7 + $0x40] sm:$0xf] %vm861, %v974
  %1039 = vst.msk [vmem:[%s7 + $0x44] sm:$0xf] %vm861, %v975
  %1040 = vst.msk [vmem:[%s7 + $0x48] sm:$0xf] %vm861, %v976
  %1041 = vst.msk [vmem:[%s7 + $0x4c] sm:$0xf] %vm861, %v977
  %1042 = vst.msk [vmem:[%s7 + $0x50] sm:$0xf] %vm861, %v978
  %1043 = vst.msk [vmem:[%s7 + $0x54] sm:$0xf] %vm861, %v979
  %1044 = vst.msk [vmem:[%s7 + $0x58] sm:$0xf] %vm861, %v980
  %1045 = vst.msk [vmem:[%s7 + $0x5c] sm:$0xf] %vm861, %v981
  %1046 = vst.msk [vmem:[%s7 + $0x60] sm:$0xf] %vm861, %v982
  %1047 = vst.msk [vmem:[%s7 + $0x64] sm:$0xf] %vm861, %v983
  %1048 = vst.msk [vmem:[%s7 + $0x68] sm:$0xf] %vm861, %v984
  %1049 = vst.msk [vmem:[%s7 + $0x6c] sm:$0xf] %vm861, %v985
  %1050 = vst.msk [vmem:[%s7 + $0x70] sm:$0xf] %vm861, %v986
  %1051 = vst.msk [vmem:[%s7 + $0x74] sm:$0xf] %vm861, %v987
  %1052 = vst.msk [vmem:[%s7 + $0x78] sm:$0xf] %vm861, %v988
  %1053 = vst.msk [vmem:[%s7 + $0x7c] sm:$0xf] %vm861, %v989
  %v1054 = vpack.c.bf16 %v610, %v607
  %v1055 = vpack.c.bf16 %v618, %v615
  %v1056 = vpack.c.bf16 %v626, %v623
  %v1057 = vpack.c.bf16 %v634, %v631
  %v1058 = vpack.c.bf16 %v642, %v639
  %v1059 = vpack.c.bf16 %v650, %v647
  %v1060 = vpack.c.bf16 %v658, %v655
  %v1061 = vpack.c.bf16 %v666, %v663
  %v1062 = vpack.c.bf16 %v674, %v671
  %v1063 = vpack.c.bf16 %v682, %v679
  %v1064 = vpack.c.bf16 %v690, %v687
  %v1065 = vpack.c.bf16 %v698, %v695
  %v1066 = vpack.c.bf16 %v706, %v703
  %v1067 = vpack.c.bf16 %v714, %v711
  %v1068 = vpack.c.bf16 %v722, %v719
  %v1069 = vpack.c.bf16 %v730, %v727
  %v1086 = vunpack.c.l.b16 %v1054
  %v1087 = vunpack.c.h.b16 %v1054
  %v1088 = vunpack.c.l.b16 %v1055
  %v1089 = vunpack.c.h.b16 %v1055
  %v1090 = vunpack.c.l.b16 %v1056
  %v1091 = vunpack.c.h.b16 %v1056
  %v1092 = vunpack.c.l.b16 %v1057
  %v1093 = vunpack.c.h.b16 %v1057
  %v1094 = vunpack.c.l.b16 %v1058
  %v1095 = vunpack.c.h.b16 %v1058
  %v1096 = vunpack.c.l.b16 %v1059
  %v1097 = vunpack.c.h.b16 %v1059
  %v1098 = vunpack.c.l.b16 %v1060
  %v1099 = vunpack.c.h.b16 %v1060
  %v1100 = vunpack.c.l.b16 %v1061
  %v1101 = vunpack.c.h.b16 %v1061
  %v1102 = vunpack.c.l.b16 %v1062
  %v1103 = vunpack.c.h.b16 %v1062
  %v1104 = vunpack.c.l.b16 %v1063
  %v1105 = vunpack.c.h.b16 %v1063
  %v1106 = vunpack.c.l.b16 %v1064
  %v1107 = vunpack.c.h.b16 %v1064
  %v1108 = vunpack.c.l.b16 %v1065
  %v1109 = vunpack.c.h.b16 %v1065
  %v1110 = vunpack.c.l.b16 %v1066
  %v1111 = vunpack.c.h.b16 %v1066
  %v1112 = vunpack.c.l.b16 %v1067
  %v1113 = vunpack.c.h.b16 %v1067
  %v1114 = vunpack.c.l.b16 %v1068
  %v1115 = vunpack.c.h.b16 %v1068
  %v1116 = vunpack.c.l.b16 %v1069
  %v1117 = vunpack.c.h.b16 %v1069
  %v1118 = vpack.c.b16 %v1086, %v1086
  %v1119 = vpack.c.b16 %v1087, %v1087
  %v1120 = vpack.c.b16 %v1088, %v1088
  %v1121 = vpack.c.b16 %v1089, %v1089
  %v1122 = vpack.c.b16 %v1090, %v1090
  %v1123 = vpack.c.b16 %v1091, %v1091
  %v1124 = vpack.c.b16 %v1092, %v1092
  %v1125 = vpack.c.b16 %v1093, %v1093
  %v1126 = vpack.c.b16 %v1094, %v1094
  %v1127 = vpack.c.b16 %v1095, %v1095
  %v1128 = vpack.c.b16 %v1096, %v1096
  %v1129 = vpack.c.b16 %v1097, %v1097
  %v1130 = vpack.c.b16 %v1098, %v1098
  %v1131 = vpack.c.b16 %v1099, %v1099
  %v1132 = vpack.c.b16 %v1100, %v1100
  %v1133 = vpack.c.b16 %v1101, %v1101
  %v1134 = vpack.c.b16 %v1102, %v1102
  %v1135 = vpack.c.b16 %v1103, %v1103
  %v1136 = vpack.c.b16 %v1104, %v1104
  %v1137 = vpack.c.b16 %v1105, %v1105
  %v1138 = vpack.c.b16 %v1106, %v1106
  %v1139 = vpack.c.b16 %v1107, %v1107
  %v1140 = vpack.c.b16 %v1108, %v1108
  %v1141 = vpack.c.b16 %v1109, %v1109
  %v1142 = vpack.c.b16 %v1110, %v1110
  %v1143 = vpack.c.b16 %v1111, %v1111
  %v1144 = vpack.c.b16 %v1112, %v1112
  %v1145 = vpack.c.b16 %v1113, %v1113
  %v1146 = vpack.c.b16 %v1114, %v1114
  %v1147 = vpack.c.b16 %v1115, %v1115
  %v1148 = vpack.c.b16 %v1116, %v1116
  %v1149 = vpack.c.b16 %v1117, %v1117
  %1182 = vst.msk [vmem:[%s8] sm:$0xf] %vm861, %v1118
  %1183 = vst.msk [vmem:[%s8 + $0x4] sm:$0xf] %vm861, %v1119
  %1184 = vst.msk [vmem:[%s8 + $0x8] sm:$0xf] %vm861, %v1120
  %1185 = vst.msk [vmem:[%s8 + $0xc] sm:$0xf] %vm861, %v1121
  %1186 = vst.msk [vmem:[%s8 + $0x10] sm:$0xf] %vm861, %v1122
  %1187 = vst.msk [vmem:[%s8 + $0x14] sm:$0xf] %vm861, %v1123
  %1188 = vst.msk [vmem:[%s8 + $0x18] sm:$0xf] %vm861, %v1124
  %1189 = vst.msk [vmem:[%s8 + $0x1c] sm:$0xf] %vm861, %v1125
  %1190 = vst.msk [vmem:[%s8 + $0x20] sm:$0xf] %vm861, %v1126
  %1191 = vst.msk [vmem:[%s8 + $0x24] sm:$0xf] %vm861, %v1127
  %1192 = vst.msk [vmem:[%s8 + $0x28] sm:$0xf] %vm861, %v1128
  %1193 = vst.msk [vmem:[%s8 + $0x2c] sm:$0xf] %vm861, %v1129
  %1194 = vst.msk [vmem:[%s8 + $0x30] sm:$0xf] %vm861, %v1130
  %1195 = vst.msk [vmem:[%s8 + $0x34] sm:$0xf] %vm861, %v1131
  %1196 = vst.msk [vmem:[%s8 + $0x38] sm:$0xf] %vm861, %v1132
  %1197 = vst.msk [vmem:[%s8 + $0x3c] sm:$0xf] %vm861, %v1133
  %1198 = vst.msk [vmem:[%s8 + $0x40] sm:$0xf] %vm861, %v1134
  %1199 = vst.msk [vmem:[%s8 + $0x44] sm:$0xf] %vm861, %v1135
  %1200 = vst.msk [vmem:[%s8 + $0x48] sm:$0xf] %vm861, %v1136
  %1201 = vst.msk [vmem:[%s8 + $0x4c] sm:$0xf] %vm861, %v1137
  %1202 = vst.msk [vmem:[%s8 + $0x50] sm:$0xf] %vm861, %v1138
  %1203 = vst.msk [vmem:[%s8 + $0x54] sm:$0xf] %vm861, %v1139
  %1204 = vst.msk [vmem:[%s8 + $0x58] sm:$0xf] %vm861, %v1140
  %1205 = vst.msk [vmem:[%s8 + $0x5c] sm:$0xf] %vm861, %v1141
  %1206 = vst.msk [vmem:[%s8 + $0x60] sm:$0xf] %vm861, %v1142
  %1207 = vst.msk [vmem:[%s8 + $0x64] sm:$0xf] %vm861, %v1143
  %1208 = vst.msk [vmem:[%s8 + $0x68] sm:$0xf] %vm861, %v1144
  %1209 = vst.msk [vmem:[%s8 + $0x6c] sm:$0xf] %vm861, %v1145
  %1210 = vst.msk [vmem:[%s8 + $0x70] sm:$0xf] %vm861, %v1146
  %1211 = vst.msk [vmem:[%s8 + $0x74] sm:$0xf] %vm861, %v1147
  %1212 = vst.msk [vmem:[%s8 + $0x78] sm:$0xf] %vm861, %v1148
  %1213 = vst.msk [vmem:[%s8 + $0x7c] sm:$0xf] %vm861, %v1149
  // Predicated region
  $region26: #{tpu_custom_call.1} parent=0 // pred_check
    _
  $region27: #{tpu_custom_call.1} parent=0 // pred_check_branch
    %1215 = sbr.rel (0) target = $region29
  $region28: #{tpu_custom_call.1} parent=0 // pred_region
    _
  $region29: #{tpu_custom_call.1} parent=0 // pred_fallthru
    _
  // Predicated region
  $region30: #{tpu_custom_call.1} parent=0 // pred_check
    _
  $region31: #{tpu_custom_call.1} parent=0 // pred_check_branch
    %1217 = sbr.rel (0) target = $region33
  $region32: #{tpu_custom_call.1} parent=0 // pred_region
    _
  $region33: #{tpu_custom_call.1} parent=0 // pred_fallthru
    _
  // Predicated region
  $region34: #{tpu_custom_call.1} parent=0 // pred_check
    _
  $region35: #{tpu_custom_call.1} parent=0 // pred_check_branch
    %1219 = sbr.rel (0) target = $region37
  $region36: #{tpu_custom_call.1} parent=0 // pred_region
    _
  $region37: #{tpu_custom_call.1} parent=0 // pred_fallthru
    _
  // Predicated region
  $region38: #{tpu_custom_call.1} parent=0 // pred_check
    _
  $region39: #{tpu_custom_call.1} parent=0 // pred_check_branch
    %1221 = sbr.rel (0) target = $region41
  $region40: #{tpu_custom_call.1} parent=0 // pred_region
    _
  $region41: #{tpu_custom_call.1} parent=0 // pred_fallthru
    _
  // Predicated region
  $region42: #{tpu_custom_call.1} parent=0 // pred_check
    _
  $region43: #{tpu_custom_call.1} parent=0 // pred_check_branch
    %1223 = sbr.rel (0) target = $region45
  $region44: #{tpu_custom_call.1} parent=0 // pred_region
    _
  $region45: #{tpu_custom_call.1} parent=0 // pred_fallthru
    _
  // Predicated region
  $region46: #{tpu_custom_call.1} parent=0 // pred_check
    _
  $region47: #{tpu_custom_call.1} parent=0 // pred_check_branch
    %1225 = sbr.rel (0) target = $region49
  $region48: #{tpu_custom_call.1} parent=0 // pred_region
    _
  $region49: #{tpu_custom_call.1} parent=0 // pred_fallthru
    _

</llo_original>
